<compile_context>
chip_gen: v7x
topology: tpu7x:2x2x1
jax: 0.10.0
libtpu: 0.0.40
codegen_flags: <defaults>
</compile_context>

<pallas_src>
import functools
import math

import jax
import jax.numpy as jnp
from jax.experimental import pallas as pl
from jax.experimental.pallas import tpu as pltpu


# ------------------------------- fused kernel ---------------------------------
def _mtan_kernel(q_ref, k_ref, v_ref,
                 wq_ref, bq_ref, wk_ref, bk_ref, wo_ref, bo_ref,
                 out_ref, *, num_heads, block_b, scale, matmul_dtype):
    """Fused multi-time attention for one batch block.

    Shapes (per grid step):
      q_ref  : (Bb, T, E)        time-embedded queries
      k_ref  : (Bb, R, E)        time-embedded keys
      v_ref  : (Bb, R, D)        values
      wq_ref : (H, E, ek)        per-head query projection (ek = E // H)
      bq_ref : (H, 1, ek)
      wk_ref : (H, E, ek)        per-head key projection
      bk_ref : (H, 1, ek)
      wo_ref : (H, D, N)         per-head slice of the output projection
      bo_ref : (1, N)
      out_ref: (Bb, T, N)        N = nhidden
    """
    T = q_ref.shape[1]
    N = out_ref.shape[2]
    bo = bo_ref[...]                                     # (1, N), f32

    for b in range(block_b):                             # small static batch loop
        q = q_ref[b]                                     # (T, E)  matmul_dtype
        k = k_ref[b]                                     # (R, E)
        v = v_ref[b]                                     # (R, D)

        y = jnp.zeros((T, N), jnp.float32)
        for h in range(num_heads):                       # small static head loop
            # Per-head projections: (T,E)@(E,ek) / (R,E)@(E,ek), f32 accumulate.
            qh = jnp.dot(q, wq_ref[h],
                         preferred_element_type=jnp.float32) + bq_ref[h]
            kh = jnp.dot(k, wk_ref[h],
                         preferred_element_type=jnp.float32) + bk_ref[h]

            # Scaled dot-product scores: (T, ek) x (R, ek)^T -> (T, R).
            s = jax.lax.dot_general(
                qh.astype(matmul_dtype), kh.astype(matmul_dtype),
                (((1,), (1,)), ((), ())),
                preferred_element_type=jnp.float32) * scale

            # Softmax over the key/reference axis (== PyTorch softmax over
            # dim=-2 of the repeat_interleaved scores when mask is None).
            # Elementwise math stays f32; EUP reciprocal is approximate (~1e-3).
            s = s - jnp.max(s, axis=-1, keepdims=True)
            e = jnp.exp(s)
            inv = pl.reciprocal(jnp.sum(e, axis=-1, keepdims=True), approx=True)
            p_attn = (e * inv).astype(matmul_dtype)      # (T, R)

            head = jnp.dot(p_attn, v,
                           preferred_element_type=jnp.float32)   # (T, D)
            # Accumulate the output projection per head (no lane concat).
            y = y + jnp.dot(head.astype(matmul_dtype), wo_ref[h],
                            preferred_element_type=jnp.float32)  # (T, N)

        out_ref[b] = (y + bo).astype(out_ref.dtype)


# --------------------------------- wrapper ------------------------------------
def _pick_block_b(B):
    """Largest batch block that still gives >= 8/4/2 grid steps (pipelining +
    both TensorCores on v7x); falls back to the whole batch for B == 1."""
    for steps in (8, 4, 2):
        if B >= steps and B % steps == 0:
            return B // steps
    return 1


def multi_time_attention(query, key, value, params, *, num_heads=1,
                         block_b=None, matmul_dtype=jnp.float32,
                         vmem_limit_bytes=None):
    """query: (B,T,E), key: (B,R,E), value: (B,R,D) -> (B,T,nhidden)."""
    B, T, E = query.shape
    Bk, R, D = value.shape
    assert Bk == B and key.shape == (B, R, E)
    assert E % num_heads == 0
    ek = E // num_heads
    N = params['wo'].shape[1]
    assert params['wo'].shape[0] == num_heads * D

    if block_b is None:
        block_b = _pick_block_b(B)
    assert B % block_b == 0
    grid = (B // block_b,)

    # Per-head weight layouts: head on the leading axis so the kernel indexes
    # it with cheap leading-axis loads instead of sub-128-lane slices.
    wq_h = params['wq'].reshape(E, num_heads, ek).transpose(1, 0, 2)
    wk_h = params['wk'].reshape(E, num_heads, ek).transpose(1, 0, 2)
    bq_h = params['bq'].reshape(1, num_heads, ek).transpose(1, 0, 2)
    bk_h = params['bk'].reshape(1, num_heads, ek).transpose(1, 0, 2)
    wo_h = params['wo'].reshape(num_heads, D, N)
    bo = params['bo']

    # MXU operands (possibly bf16); biases + softmax math stay f32.
    q_in = query.astype(matmul_dtype)
    k_in = key.astype(matmul_dtype)
    v_in = value.astype(matmul_dtype)
    wq_h = wq_h.astype(matmul_dtype)
    wk_h = wk_h.astype(matmul_dtype)
    wo_h = wo_h.astype(matmul_dtype)
    bq_h = bq_h.astype(jnp.float32)
    bk_h = bk_h.astype(jnp.float32)
    bo = bo.astype(jnp.float32)

    def resident3(arr):   # full array, constant index -> stays VMEM-resident
        return pl.BlockSpec(arr.shape, lambda i: (0, 0, 0))

    kernel = functools.partial(
        _mtan_kernel, num_heads=num_heads, block_b=block_b,
        scale=1.0 / math.sqrt(ek), matmul_dtype=matmul_dtype)

    cp_kwargs = dict(dimension_semantics=("parallel",))
    if vmem_limit_bytes is not None:     # raise for large block_b on v5e/v6e
        cp_kwargs["vmem_limit_bytes"] = vmem_limit_bytes

    out = pl.pallas_call(
        kernel,
        out_shape=jax.ShapeDtypeStruct((B, T, N), jnp.float32),
        grid=grid,
        in_specs=[
            pl.BlockSpec((block_b, T, E), lambda i: (i, 0, 0)),
            pl.BlockSpec((block_b, R, E), lambda i: (i, 0, 0)),
            pl.BlockSpec((block_b, R, D), lambda i: (i, 0, 0)),
            resident3(wq_h), resident3(bq_h),
            resident3(wk_h), resident3(bk_h),
            resident3(wo_h),
            pl.BlockSpec(bo.shape, lambda i: (0, 0)),
        ],
        out_specs=pl.BlockSpec((block_b, T, N), lambda i: (i, 0, 0)),
        compiler_params=pltpu.CompilerParams(**cp_kwargs),
    )(q_in, k_in, v_in, wq_h, bq_h, wk_h, bk_h, wo_h, bo)

    return out


# --------------------------- parameters (synthetic) ----------------------------
def init_params(key, input_dim, nhidden, embed_time, num_heads):
    """Linear weights stored pre-transposed as (in, out); biases as (1, out)."""
    E = embed_time
    keys = jax.random.split(key, 6)

    def w(k, shape, scale=0.1):
        return scale * jax.random.normal(k, shape, jnp.float32)

    return {
        'wq': w(keys[0], (E, E)), 'bq': w(keys[1], (1, E)),
        'wk': w(keys[2], (E, E)), 'bk': w(keys[3], (1, E)),
        'wo': w(keys[4], (input_dim * num_heads, nhidden)),
        'bo': w(keys[5], (1, nhidden)),
    }


# ------------------------------ pure-JAX reference -----------------------------
def reference_forward(query, key, value, params, *, num_heads):
    """Mirrors multiTimeAttention.forward (mask=None, dropout=None)."""
    B, T, E = query.shape
    _, R, D = value.shape
    ek = E // num_heads

    qp = query @ params['wq'] + params['bq']                     # (B, T, E)
    kp = key @ params['wk'] + params['bk']                       # (B, R, E)
    qh = qp.reshape(B, T, num_heads, ek).transpose(0, 2, 1, 3)   # (B, h, T, ek)
    kh = kp.reshape(B, R, num_heads, ek).transpose(0, 2, 1, 3)   # (B, h, R, ek)

    scores = jnp.einsum('bhte,bhre->bhtr', qh, kh) / math.sqrt(ek)
    p_attn = jax.nn.softmax(scores, axis=-1)                     # softmax over R
    x = jnp.einsum('bhtr,brd->bhtd', p_attn, value)              # (B, h, T, D)
    x = x.transpose(0, 2, 1, 3).reshape(B, T, num_heads * D)     # concat heads
    return x @ params['wo'] + params['bo']                       # (B, T, nhidden)


# ----------------------------------- main --------------------------------------
if __name__ == "__main__":
    B, T, R = 2, 12, 8                        # batch, query times, key/ref times
    input_dim, nhidden, embed_time = 4, 16, 16

    root = jax.random.PRNGKey(0)
    kq, kk, kv, kp1, kp2 = jax.random.split(root, 5)
    query = jax.random.normal(kq, (B, T, embed_time), jnp.float32)
    key_in = jax.random.normal(kk, (B, R, embed_time), jnp.float32)
    value = jax.random.normal(kv, (B, R, input_dim), jnp.float32)

    for num_heads, pkey in ((1, kp1), (2, kp2)):
        params = init_params(pkey, input_dim, nhidden, embed_time, num_heads)
        ref = reference_forward(query, key_in, value, params,
                                num_heads=num_heads)

        # f32 MXU operands: tight check against the f32 reference.
        out_f32 = multi_time_attention(query, key_in, value, params,
                                       num_heads=num_heads,
                                       matmul_dtype=jnp.float32)
        out_f32 = jax.block_until_ready(out_f32)
        assert out_f32.shape == (B, T, nhidden), out_f32.shape
        err_f32 = float(jnp.max(jnp.abs(out_f32 - ref)))
        assert err_f32 < 5e-3, f"f32 path max err {err_f32}"

        # bf16 MXU operands (perf configuration): looser check.
        out_bf16 = multi_time_attention(query, key_in, value, params,
                                        num_heads=num_heads,
                                        matmul_dtype=jnp.bfloat16)
        out_bf16 = jax.block_until_ready(out_bf16)
        assert out_bf16.shape == (B, T, nhidden), out_bf16.shape
        err_bf16 = float(jnp.max(jnp.abs(out_bf16 - ref)))
        assert err_bf16 < 5e-2, f"bf16 path max err {err_bf16}"

    print("KERNEL_OK")
</pallas_src>

<mosaic_0001>
module attributes {stable_mosaic.version = 11 : i64} {
  func.func @_mtan_kernel(%arg0: i32, %arg1: memref<1x12x16xf32, #tpu.memory_space<vmem>>, %arg2: memref<1x8x16xf32, #tpu.memory_space<vmem>>, %arg3: memref<1x8x4xf32, #tpu.memory_space<vmem>>, %arg4: memref<1x16x16xf32, #tpu.memory_space<vmem>>, %arg5: memref<1x1x16xf32, #tpu.memory_space<vmem>>, %arg6: memref<1x16x16xf32, #tpu.memory_space<vmem>>, %arg7: memref<1x1x16xf32, #tpu.memory_space<vmem>>, %arg8: memref<1x4x16xf32, #tpu.memory_space<vmem>>, %arg9: memref<1x16xf32, #tpu.memory_space<vmem>>, %arg10: memref<1x12x16xf32, #tpu.memory_space<vmem>>) attributes {dimension_semantics = [#tpu.dimension_semantics<parallel>], iteration_bounds = array<i64: 2>, scalar_prefetch = 0 : i64, scratch_operands = 0 : i64, tpu.core_type = #tpu.core_type<tc>, window_params = [{transform_indices = @transform_0, window_bounds = array<i64: 1, 12, 16>}, {transform_indices = @transform_1, window_bounds = array<i64: 1, 8, 16>}, {transform_indices = @transform_2, window_bounds = array<i64: 1, 8, 4>}, {pipeline_mode = #tpu.pipeline_mode<synchronous>, transform_indices = @transform_3, window_bounds = array<i64: 1, 16, 16>}, {pipeline_mode = #tpu.pipeline_mode<synchronous>, transform_indices = @transform_4, window_bounds = array<i64: 1, 1, 16>}, {pipeline_mode = #tpu.pipeline_mode<synchronous>, transform_indices = @transform_5, window_bounds = array<i64: 1, 16, 16>}, {pipeline_mode = #tpu.pipeline_mode<synchronous>, transform_indices = @transform_6, window_bounds = array<i64: 1, 1, 16>}, {pipeline_mode = #tpu.pipeline_mode<synchronous>, transform_indices = @transform_7, window_bounds = array<i64: 1, 4, 16>}, {pipeline_mode = #tpu.pipeline_mode<synchronous>, transform_indices = @transform_8, window_bounds = array<i64: 1, 16>}, {transform_indices = @transform_9, window_bounds = array<i64: 1, 12, 16>}]} {
    %c0 = arith.constant 0 : index
    %c0_0 = arith.constant 0 : index
    %0 = vector.load %arg9[%c0, %c0_0] : memref<1x16xf32, #tpu.memory_space<vmem>>, vector<1x16xf32>
    %c0_1 = arith.constant 0 : index
    %c0_2 = arith.constant 0 : index
    %c0_3 = arith.constant 0 : index
    %1 = vector.load %arg1[%c0_1, %c0_2, %c0_3] : memref<1x12x16xf32, #tpu.memory_space<vmem>>, vector<1x12x16xf32>
    %2 = vector.shape_cast %1 : vector<1x12x16xf32> to vector<12x16xf32>
    %c0_4 = arith.constant 0 : index
    %c0_5 = arith.constant 0 : index
    %c0_6 = arith.constant 0 : index
    %3 = vector.load %arg2[%c0_4, %c0_5, %c0_6] : memref<1x8x16xf32, #tpu.memory_space<vmem>>, vector<1x8x16xf32>
    %4 = vector.shape_cast %3 : vector<1x8x16xf32> to vector<8x16xf32>
    %c0_7 = arith.constant 0 : index
    %c0_8 = arith.constant 0 : index
    %c0_9 = arith.constant 0 : index
    %5 = vector.load %arg3[%c0_7, %c0_8, %c0_9] : memref<1x8x4xf32, #tpu.memory_space<vmem>>, vector<1x8x4xf32>
    %6 = vector.shape_cast %5 : vector<1x8x4xf32> to vector<8x4xf32>
    %cst = arith.constant 0.000000e+00 : f32
    %7 = vector.broadcast %cst : f32 to vector<12x16xf32>
    %c0_10 = arith.constant 0 : index
    %c0_11 = arith.constant 0 : index
    %c0_12 = arith.constant 0 : index
    %8 = vector.load %arg4[%c0_10, %c0_11, %c0_12] : memref<1x16x16xf32, #tpu.memory_space<vmem>>, vector<1x16x16xf32>
    %9 = vector.shape_cast %8 : vector<1x16x16xf32> to vector<16x16xf32>
    %cst_13 = arith.constant dense<0.000000e+00> : vector<12x16xf32>
    %10 = tpu.matmul %2, %9, %cst_13 {dimension_numbers = #tpu.dot_dimension_numbers<[1], [0], [0], [1], [0, 0, 1, 1], [], []>} : vector<12x16xf32>, vector<16x16xf32>, vector<12x16xf32> -> vector<12x16xf32>
    %c0_14 = arith.constant 0 : index
    %c0_15 = arith.constant 0 : index
    %c0_16 = arith.constant 0 : index
    %11 = vector.load %arg5[%c0_14, %c0_15, %c0_16] : memref<1x1x16xf32, #tpu.memory_space<vmem>>, vector<1x1x16xf32>
    %12 = vector.shape_cast %11 : vector<1x1x16xf32> to vector<1x16xf32>
    %13 = vector.broadcast %12 : vector<1x16xf32> to vector<12x16xf32>
    %14 = arith.addf %10, %13 : vector<12x16xf32>
    %c0_17 = arith.constant 0 : index
    %c0_18 = arith.constant 0 : index
    %c0_19 = arith.constant 0 : index
    %15 = vector.load %arg6[%c0_17, %c0_18, %c0_19] : memref<1x16x16xf32, #tpu.memory_space<vmem>>, vector<1x16x16xf32>
    %16 = vector.shape_cast %15 : vector<1x16x16xf32> to vector<16x16xf32>
    %cst_20 = arith.constant dense<0.000000e+00> : vector<8x16xf32>
    %17 = tpu.matmul %4, %16, %cst_20 {dimension_numbers = #tpu.dot_dimension_numbers<[1], [0], [0], [1], [0, 0, 1, 1], [], []>} : vector<8x16xf32>, vector<16x16xf32>, vector<8x16xf32> -> vector<8x16xf32>
    %c0_21 = arith.constant 0 : index
    %c0_22 = arith.constant 0 : index
    %c0_23 = arith.constant 0 : index
    %18 = vector.load %arg7[%c0_21, %c0_22, %c0_23] : memref<1x1x16xf32, #tpu.memory_space<vmem>>, vector<1x1x16xf32>
    %19 = vector.shape_cast %18 : vector<1x1x16xf32> to vector<1x16xf32>
    %20 = vector.broadcast %19 : vector<1x16xf32> to vector<8x16xf32>
    %21 = arith.addf %17, %20 : vector<8x16xf32>
    %cst_24 = arith.constant dense<0.000000e+00> : vector<12x8xf32>
    %22 = tpu.matmul %14, %21, %cst_24 {dimension_numbers = #tpu.dot_dimension_numbers<[1], [1], [0], [0], [0, 0, 1, 0], [], []>} : vector<12x16xf32>, vector<8x16xf32>, vector<12x8xf32> -> vector<12x8xf32>
    %cst_25 = arith.constant 2.500000e-01 : f32
    %23 = vector.broadcast %cst_25 : f32 to vector<12x8xf32>
    %24 = arith.mulf %22, %23 : vector<12x8xf32>
    %cst_26 = arith.constant dense<0xFF800000> : vector<12xf32>
    %25 = vector.multi_reduction <maximumf>, %24, %cst_26 [1] : vector<12x8xf32> to vector<12xf32>
    %26 = vector.shape_cast %25 : vector<12xf32> to vector<12x1xf32>
    %27 = vector.broadcast %26 : vector<12x1xf32> to vector<12x8xf32>
    %28 = arith.subf %24, %27 : vector<12x8xf32>
    %29 = math.exp %28 : vector<12x8xf32>
    %cst_27 = arith.constant dense<0.000000e+00> : vector<12xf32>
    %30 = vector.multi_reduction <add>, %29, %cst_27 [1] : vector<12x8xf32> to vector<12xf32>
    %31 = vector.shape_cast %30 : vector<12xf32> to vector<12x1xf32>
    %32 = tpu.reciprocal %31 {approx = true} : vector<12x1xf32> -> vector<12x1xf32>
    %33 = vector.broadcast %32 : vector<12x1xf32> to vector<12x8xf32>
    %34 = arith.mulf %29, %33 : vector<12x8xf32>
    %cst_28 = arith.constant dense<0.000000e+00> : vector<12x4xf32>
    %35 = tpu.matmul %34, %6, %cst_28 {dimension_numbers = #tpu.dot_dimension_numbers<[1], [0], [0], [1], [0, 0, 1, 1], [], []>} : vector<12x8xf32>, vector<8x4xf32>, vector<12x4xf32> -> vector<12x4xf32>
    %c0_29 = arith.constant 0 : index
    %c0_30 = arith.constant 0 : index
    %c0_31 = arith.constant 0 : index
    %36 = vector.load %arg8[%c0_29, %c0_30, %c0_31] : memref<1x4x16xf32, #tpu.memory_space<vmem>>, vector<1x4x16xf32>
    %37 = vector.shape_cast %36 : vector<1x4x16xf32> to vector<4x16xf32>
    %cst_32 = arith.constant dense<0.000000e+00> : vector<12x16xf32>
    %38 = tpu.matmul %35, %37, %cst_32 {dimension_numbers = #tpu.dot_dimension_numbers<[1], [0], [0], [1], [0, 0, 1, 1], [], []>} : vector<12x4xf32>, vector<4x16xf32>, vector<12x16xf32> -> vector<12x16xf32>
    %39 = arith.addf %7, %38 : vector<12x16xf32>
    %40 = vector.broadcast %0 : vector<1x16xf32> to vector<12x16xf32>
    %41 = arith.addf %39, %40 : vector<12x16xf32>
    %c0_33 = arith.constant 0 : index
    %c0_34 = arith.constant 0 : index
    %c0_35 = arith.constant 0 : index
    %42 = vector.load %arg10[%c0_33, %c0_34, %c0_35] : memref<1x12x16xf32, #tpu.memory_space<vmem>>, vector<1x12x16xf32>
    %43 = vector.shape_cast %42 : vector<1x12x16xf32> to vector<12x16xf32>
    %44 = vector.shape_cast %41 : vector<12x16xf32> to vector<1x12x16xf32>
    tpu.vector_store %arg10[%c0_33, %c0_34, %c0_35], %44 {strides = array<i32>} : memref<1x12x16xf32, #tpu.memory_space<vmem>>, vector<1x12x16xf32>,
    return
  }
  func.func @transform_0(%arg0: i32) -> (i32, i32, i32) {
    %c0_i32 = arith.constant 0 : i32
    %c0_i32_0 = arith.constant 0 : i32
    %c0_i32_1 = arith.constant 0 : i32
    return %arg0, %c0_i32, %c0_i32_0 : i32, i32, i32
  }
  func.func @transform_1(%arg0: i32) -> (i32, i32, i32) {
    %c0_i32 = arith.constant 0 : i32
    %c0_i32_0 = arith.constant 0 : i32
    %c0_i32_1 = arith.constant 0 : i32
    return %arg0, %c0_i32, %c0_i32_0 : i32, i32, i32
  }
  func.func @transform_2(%arg0: i32) -> (i32, i32, i32) {
    %c0_i32 = arith.constant 0 : i32
    %c0_i32_0 = arith.constant 0 : i32
    %c0_i32_1 = arith.constant 0 : i32
    return %arg0, %c0_i32, %c0_i32_0 : i32, i32, i32
  }
  func.func @transform_3(%arg0: i32) -> (i32, i32, i32) {
    %c0_i32 = arith.constant 0 : i32
    %c0_i32_0 = arith.constant 0 : i32
    %c0_i32_1 = arith.constant 0 : i32
    %c0_i32_2 = arith.constant 0 : i32
    return %c0_i32, %c0_i32_0, %c0_i32_1 : i32, i32, i32
  }
  func.func @transform_4(%arg0: i32) -> (i32, i32, i32) {
    %c0_i32 = arith.constant 0 : i32
    %c0_i32_0 = arith.constant 0 : i32
    %c0_i32_1 = arith.constant 0 : i32
    %c0_i32_2 = arith.constant 0 : i32
    return %c0_i32, %c0_i32_0, %c0_i32_1 : i32, i32, i32
  }
  func.func @transform_5(%arg0: i32) -> (i32, i32, i32) {
    %c0_i32 = arith.constant 0 : i32
    %c0_i32_0 = arith.constant 0 : i32
    %c0_i32_1 = arith.constant 0 : i32
    %c0_i32_2 = arith.constant 0 : i32
    return %c0_i32, %c0_i32_0, %c0_i32_1 : i32, i32, i32
  }
  func.func @transform_6(%arg0: i32) -> (i32, i32, i32) {
    %c0_i32 = arith.constant 0 : i32
    %c0_i32_0 = arith.constant 0 : i32
    %c0_i32_1 = arith.constant 0 : i32
    %c0_i32_2 = arith.constant 0 : i32
    return %c0_i32, %c0_i32_0, %c0_i32_1 : i32, i32, i32
  }
  func.func @transform_7(%arg0: i32) -> (i32, i32, i32) {
    %c0_i32 = arith.constant 0 : i32
    %c0_i32_0 = arith.constant 0 : i32
    %c0_i32_1 = arith.constant 0 : i32
    %c0_i32_2 = arith.constant 0 : i32
    return %c0_i32, %c0_i32_0, %c0_i32_1 : i32, i32, i32
  }
  func.func @transform_8(%arg0: i32) -> (i32, i32) {
    %c0_i32 = arith.constant 0 : i32
    %c0_i32_0 = arith.constant 0 : i32
    %c0_i32_1 = arith.constant 0 : i32
    return %c0_i32, %c0_i32_0 : i32, i32
  }
  func.func @transform_9(%arg0: i32) -> (i32, i32, i32) {
    %c0_i32 = arith.constant 0 : i32
    %c0_i32_0 = arith.constant 0 : i32
    %c0_i32_1 = arith.constant 0 : i32
    return %arg0, %c0_i32, %c0_i32_0 : i32, i32, i32
  }
}

</mosaic_0001>

<llo_original>
// kernel: tpu_custom_call.1
$region0: #{tpu_custom_call.1}
  #allocation0 [shape = 'u32[]', space=smem, size = 0x4, offset = 0x4, fixed_abs, tag = 'smem constant byte address 0x4 - core index']
  #allocation1 [shape = 'u32[144,128]{1,0:T(1,128)}', space=vmem, size = 0x12000, scoped, tag = 'internal scratch']
  %s0 = inlined_call_operand.vmem [shape: f32[2,12,16], index: 0, kind: input, shape index: {}]
  %s1 = inlined_call_operand.vmem [shape: f32[2,8,16], index: 1, kind: input, shape index: {}]
  %s2 = inlined_call_operand.vmem [shape: f32[2,8,4], index: 2, kind: input, shape index: {}]
  %s3 = inlined_call_operand.vmem [shape: f32[1,16,16], index: 3, kind: input, shape index: {}]
  %s4 = inlined_call_operand.vmem [shape: f32[1,1,16], index: 4, kind: input, shape index: {}]
  %s5 = inlined_call_operand.vmem [shape: f32[1,16,16], index: 5, kind: input, shape index: {}]
  %s6 = inlined_call_operand.vmem [shape: f32[1,1,16], index: 6, kind: input, shape index: {}]
  %s7 = inlined_call_operand.vmem [shape: f32[1,4,16], index: 7, kind: input, shape index: {}]
  %s8 = inlined_call_operand.vmem [shape: f32[1,16], index: 8, kind: input, shape index: {}]
  %s9 = inlined_call_operand.vmem [shape: f32[2,12,16], index: 9, kind: output, shape index: {}]
  %s10 = sld [smem:[#allocation0]]
  $region69: #{tpu_custom_call.1} parent=0
    _
  %s12 = ssub.s32 1, %s10
  %s13 = scalar_select 0, %s12, %s10
  loop: start=0, step=1, limit=4
  $region2: #{tpu_custom_call.1} parent=0 // loop_pre_header
    _
  $region3: #{tpu_custom_call.1} parent=0 // loop_header
    %s15 = sphi 0, %s19
    %p16 = scmp.ge.s32.totalorder %s15, 4
    %s25 = sphi 0, %s27
    %s28 = sphi 0, %s25
    %s29 = sphi 0, %s28
    %s45 = sphi 0, %s29
    %s51 = sphi 0, %s53
    %s54 = sphi 0, %s51
    %s55 = sphi 0, %s54
    %s71 = sphi 0, %s55
    %s77 = sphi 0, %s79
    %s80 = sphi 0, %s77
    %s81 = sphi 0, %s80
    %s97 = sphi 0, %s81
    %s101 = sphi 0, %s101
    %s103 = sphi 0, %s101
    %s104 = sphi 0, %s103
    %s118 = sphi 0, %s104
    %s122 = sphi 0, %s122
    %s124 = sphi 0, %s122
    %s125 = sphi 0, %s124
    %s139 = sphi 0, %s125
    %s143 = sphi 0, %s143
    %s145 = sphi 0, %s143
    %s146 = sphi 0, %s145
    %s160 = sphi 0, %s146
    %s164 = sphi 0, %s164
    %s166 = sphi 0, %s164
    %s167 = sphi 0, %s166
    %s181 = sphi 0, %s167
    %s185 = sphi 0, %s185
    %s187 = sphi 0, %s185
    %s188 = sphi 0, %s187
    %s202 = sphi 0, %s188
    %s206 = sphi 0, %s206
    %s208 = sphi 0, %s206
    %s209 = sphi 0, %s208
    %s223 = sphi 0, %s209
    %s229 = sphi 0, %s231
    %s232 = sphi 0, %s229
    %s233 = sphi 0, %s232
    %s249 = sphi 0, %s233
  $region4: #{tpu_custom_call.1} parent=0 // loop_header_branch
    %18 = sbr.rel (%p16) target = $region8
  $region5: #{tpu_custom_call.1} parent=0 // loop_body
    %s20 = ssub.s32 %s15, 1
    %s21 = ssub.s32 %s15, 2
    %s22 = sadd.s32 %s15, 1
    %s23 = ssub.s32 %s15, %s22
    %p24 = scmp.eq.s32.totalorder %s23, 0
    %s26 = sadd.s32 %s25, 1
    %s27 = scalar_select %p24, %s25, %s26
    %p30 = pneg %p24
    %p31 = scmp.eq.s32.totalorder %s15, 1
    %p32 = por %p30, %p31
    %p33 = scmp.ne.s32.totalorder %s25, %s28
    %p34 = scmp.eq.s32.totalorder %s15, 0
    %p35 = por %p33, %p34
    %p36 = scmp.ne.s32.totalorder %s25, %s28
    %p37 = scmp.eq.s32.totalorder %s20, 1
    %p38 = por %p36, %p37
    %p39 = scmp.ne.s32.totalorder %s28, %s29
    %p40 = scmp.eq.s32.totalorder %s20, 0
    %p41 = por %p39, %p40
    %p42 = scmp.ne.s32.totalorder %s28, %s29
    %p43 = scmp.eq.s32.totalorder %s21, 1
    %p44 = por %p42, %p43
    %p46 = scmp.ne.s32.totalorder %s29, %s45
    %p47 = scmp.eq.s32.totalorder %s21, 0
    %p48 = por %p46, %p47
    %s49 = ssub.s32 %s15, %s22
    %p50 = scmp.eq.s32.totalorder %s49, 0
    %s52 = sadd.s32 %s51, 1
    %s53 = scalar_select %p50, %s51, %s52
    %p56 = pneg %p50
    %p57 = scmp.eq.s32.totalorder %s15, 1
    %p58 = por %p56, %p57
    %p59 = scmp.ne.s32.totalorder %s51, %s54
    %p60 = scmp.eq.s32.totalorder %s15, 0
    %p61 = por %p59, %p60
    %p62 = scmp.ne.s32.totalorder %s51, %s54
    %p63 = scmp.eq.s32.totalorder %s20, 1
    %p64 = por %p62, %p63
    %p65 = scmp.ne.s32.totalorder %s54, %s55
    %p66 = scmp.eq.s32.totalorder %s20, 0
    %p67 = por %p65, %p66
    %p68 = scmp.ne.s32.totalorder %s54, %s55
    %p69 = scmp.eq.s32.totalorder %s21, 1
    %p70 = por %p68, %p69
    %p72 = scmp.ne.s32.totalorder %s55, %s71
    %p73 = scmp.eq.s32.totalorder %s21, 0
    %p74 = por %p72, %p73
    %s75 = ssub.s32 %s15, %s22
    %p76 = scmp.eq.s32.totalorder %s75, 0
    %s78 = sadd.s32 %s77, 1
    %s79 = scalar_select %p76, %s77, %s78
    %p82 = pneg %p76
    %p83 = scmp.eq.s32.totalorder %s15, 1
    %p84 = por %p82, %p83
    %p85 = scmp.ne.s32.totalorder %s77, %s80
    %p86 = scmp.eq.s32.totalorder %s15, 0
    %p87 = por %p85, %p86
    %p88 = scmp.ne.s32.totalorder %s77, %s80
    %p89 = scmp.eq.s32.totalorder %s20, 1
    %p90 = por %p88, %p89
    %p91 = scmp.ne.s32.totalorder %s80, %s81
    %p92 = scmp.eq.s32.totalorder %s20, 0
    %p93 = por %p91, %p92
    %p94 = scmp.ne.s32.totalorder %s80, %s81
    %p95 = scmp.eq.s32.totalorder %s21, 1
    %p96 = por %p94, %p95
    %p98 = scmp.ne.s32.totalorder %s81, %s97
    %p99 = scmp.eq.s32.totalorder %s21, 0
    %p100 = por %p98, %p99
    %s102 = sadd.s32 %s101, 1
    %p105 = scmp.eq.s32.totalorder %s15, 1
    %p106 = scmp.ne.s32.totalorder %s101, %s103
    %p107 = scmp.eq.s32.totalorder %s15, 0
    %p108 = por %p106, %p107
    %p109 = scmp.ne.s32.totalorder %s101, %s103
    %p110 = scmp.eq.s32.totalorder %s20, 1
    %p111 = por %p109, %p110
    %p112 = scmp.ne.s32.totalorder %s103, %s104
    %p113 = scmp.eq.s32.totalorder %s20, 0
    %p114 = por %p112, %p113
    %p115 = scmp.ne.s32.totalorder %s103, %s104
    %p116 = scmp.eq.s32.totalorder %s21, 1
    %p117 = por %p115, %p116
    %p119 = scmp.ne.s32.totalorder %s104, %s118
    %p120 = scmp.eq.s32.totalorder %s21, 0
    %p121 = por %p119, %p120
    %s123 = sadd.s32 %s122, 1
    %p126 = scmp.eq.s32.totalorder %s15, 1
    %p127 = scmp.ne.s32.totalorder %s122, %s124
    %p128 = scmp.eq.s32.totalorder %s15, 0
    %p129 = por %p127, %p128
    %p130 = scmp.ne.s32.totalorder %s122, %s124
    %p131 = scmp.eq.s32.totalorder %s20, 1
    %p132 = por %p130, %p131
    %p133 = scmp.ne.s32.totalorder %s124, %s125
    %p134 = scmp.eq.s32.totalorder %s20, 0
    %p135 = por %p133, %p134
    %p136 = scmp.ne.s32.totalorder %s124, %s125
    %p137 = scmp.eq.s32.totalorder %s21, 1
    %p138 = por %p136, %p137
    %p140 = scmp.ne.s32.totalorder %s125, %s139
    %p141 = scmp.eq.s32.totalorder %s21, 0
    %p142 = por %p140, %p141
    %s144 = sadd.s32 %s143, 1
    %p147 = scmp.eq.s32.totalorder %s15, 1
    %p148 = scmp.ne.s32.totalorder %s143, %s145
    %p149 = scmp.eq.s32.totalorder %s15, 0
    %p150 = por %p148, %p149
    %p151 = scmp.ne.s32.totalorder %s143, %s145
    %p152 = scmp.eq.s32.totalorder %s20, 1
    %p153 = por %p151, %p152
    %p154 = scmp.ne.s32.totalorder %s145, %s146
    %p155 = scmp.eq.s32.totalorder %s20, 0
    %p156 = por %p154, %p155
    %p157 = scmp.ne.s32.totalorder %s145, %s146
    %p158 = scmp.eq.s32.totalorder %s21, 1
    %p159 = por %p157, %p158
    %p161 = scmp.ne.s32.totalorder %s146, %s160
    %p162 = scmp.eq.s32.totalorder %s21, 0
    %p163 = por %p161, %p162
    %s165 = sadd.s32 %s164, 1
    %p168 = scmp.eq.s32.totalorder %s15, 1
    %p169 = scmp.ne.s32.totalorder %s164, %s166
    %p170 = scmp.eq.s32.totalorder %s15, 0
    %p171 = por %p169, %p170
    %p172 = scmp.ne.s32.totalorder %s164, %s166
    %p173 = scmp.eq.s32.totalorder %s20, 1
    %p174 = por %p172, %p173
    %p175 = scmp.ne.s32.totalorder %s166, %s167
    %p176 = scmp.eq.s32.totalorder %s20, 0
    %p177 = por %p175, %p176
    %p178 = scmp.ne.s32.totalorder %s166, %s167
    %p179 = scmp.eq.s32.totalorder %s21, 1
    %p180 = por %p178, %p179
    %p182 = scmp.ne.s32.totalorder %s167, %s181
    %p183 = scmp.eq.s32.totalorder %s21, 0
    %p184 = por %p182, %p183
    %s186 = sadd.s32 %s185, 1
    %p189 = scmp.eq.s32.totalorder %s15, 1
    %p190 = scmp.ne.s32.totalorder %s185, %s187
    %p191 = scmp.eq.s32.totalorder %s15, 0
    %p192 = por %p190, %p191
    %p193 = scmp.ne.s32.totalorder %s185, %s187
    %p194 = scmp.eq.s32.totalorder %s20, 1
    %p195 = por %p193, %p194
    %p196 = scmp.ne.s32.totalorder %s187, %s188
    %p197 = scmp.eq.s32.totalorder %s20, 0
    %p198 = por %p196, %p197
    %p199 = scmp.ne.s32.totalorder %s187, %s188
    %p200 = scmp.eq.s32.totalorder %s21, 1
    %p201 = por %p199, %p200
    %p203 = scmp.ne.s32.totalorder %s188, %s202
    %p204 = scmp.eq.s32.totalorder %s21, 0
    %p205 = por %p203, %p204
    %s207 = sadd.s32 %s206, 1
    %p210 = scmp.eq.s32.totalorder %s15, 1
    %p211 = scmp.ne.s32.totalorder %s206, %s208
    %p212 = scmp.eq.s32.totalorder %s15, 0
    %p213 = por %p211, %p212
    %p214 = scmp.ne.s32.totalorder %s206, %s208
    %p215 = scmp.eq.s32.totalorder %s20, 1
    %p216 = por %p214, %p215
    %p217 = scmp.ne.s32.totalorder %s208, %s209
    %p218 = scmp.eq.s32.totalorder %s20, 0
    %p219 = por %p217, %p218
    %p220 = scmp.ne.s32.totalorder %s208, %s209
    %p221 = scmp.eq.s32.totalorder %s21, 1
    %p222 = por %p220, %p221
    %p224 = scmp.ne.s32.totalorder %s209, %s223
    %p225 = scmp.eq.s32.totalorder %s21, 0
    %p226 = por %p224, %p225
    %s227 = ssub.s32 %s15, %s22
    %p228 = scmp.eq.s32.totalorder %s227, 0
    %s230 = sadd.s32 %s229, 1
    %s231 = scalar_select %p228, %s229, %s230
    %p234 = pneg %p228
    %p235 = scmp.eq.s32.totalorder %s15, 1
    %p236 = por %p234, %p235
    %p237 = scmp.ne.s32.totalorder %s229, %s232
    %p238 = scmp.eq.s32.totalorder %s15, 0
    %p239 = por %p237, %p238
    %p240 = scmp.ne.s32.totalorder %s229, %s232
    %p241 = scmp.eq.s32.totalorder %s20, 1
    %p242 = por %p240, %p241
    %p243 = scmp.ne.s32.totalorder %s232, %s233
    %p244 = scmp.eq.s32.totalorder %s20, 0
    %p245 = por %p243, %p244
    %p246 = scmp.ne.s32.totalorder %s232, %s233
    %p247 = scmp.eq.s32.totalorder %s21, 1
    %p248 = por %p246, %p247
    %p250 = scmp.ne.s32.totalorder %s233, %s249
    %p251 = scmp.eq.s32.totalorder %s21, 0
    %p252 = por %p250, %p251
    %p253 = scmp.le.s32.totalorder 1, %s15
    %p254 = scmp.lt.s32.totalorder %s15, 3
    %p255 = pnand %p253, %p254
    %p256 = pneg %p255
    // Predicated region
    $region9: #{tpu_custom_call.1} parent=5 // pred_check
      _
    $region10: #{tpu_custom_call.1} parent=5 // pred_check_branch
      %258 = sbr.rel (%p255) target = $region12
    $region11: #{tpu_custom_call.1} parent=5 // pred_region
      %s259 = ssub.s32 %s15, 1
      // Predicated region
      $region13: #{tpu_custom_call.1} parent=11 // pred_check
        %p260 = pneg %p114
      $region14: #{tpu_custom_call.1} parent=11 // pred_check_branch
        %262 = sbr.rel (%p260) target = $region16
      $region15: #{tpu_custom_call.1} parent=11 // pred_region
        _
      $region16: #{tpu_custom_call.1} parent=11 // pred_fallthru
        _
      // Predicated region
      $region17: #{tpu_custom_call.1} parent=11 // pred_check
        %p263 = pneg %p135
      $region18: #{tpu_custom_call.1} parent=11 // pred_check_branch
        %265 = sbr.rel (%p263) target = $region20
      $region19: #{tpu_custom_call.1} parent=11 // pred_region
        _
      $region20: #{tpu_custom_call.1} parent=11 // pred_fallthru
        _
      // Predicated region
      $region21: #{tpu_custom_call.1} parent=11 // pred_check
        %p266 = pneg %p156
      $region22: #{tpu_custom_call.1} parent=11 // pred_check_branch
        %268 = sbr.rel (%p266) target = $region24
      $region23: #{tpu_custom_call.1} parent=11 // pred_region
        _
      $region24: #{tpu_custom_call.1} parent=11 // pred_fallthru
        _
      // Predicated region
      $region25: #{tpu_custom_call.1} parent=11 // pred_check
        %p269 = pneg %p177
      $region26: #{tpu_custom_call.1} parent=11 // pred_check_branch
        %271 = sbr.rel (%p269) target = $region28
      $region27: #{tpu_custom_call.1} parent=11 // pred_region
        _
      $region28: #{tpu_custom_call.1} parent=11 // pred_fallthru
        _
      // Predicated region
      $region29: #{tpu_custom_call.1} parent=11 // pred_check
        %p272 = pneg %p198
      $region30: #{tpu_custom_call.1} parent=11 // pred_check_branch
        %274 = sbr.rel (%p272) target = $region32
      $region31: #{tpu_custom_call.1} parent=11 // pred_region
        _
      $region32: #{tpu_custom_call.1} parent=11 // pred_fallthru
        _
      // Predicated region
      $region33: #{tpu_custom_call.1} parent=11 // pred_check
        %p275 = pneg %p219
      $region34: #{tpu_custom_call.1} parent=11 // pred_check_branch
        %277 = sbr.rel (%p275) target = $region36
      $region35: #{tpu_custom_call.1} parent=11 // pred_region
        _
      $region36: #{tpu_custom_call.1} parent=11 // pred_fallthru
        _
    $region12: #{tpu_custom_call.1} parent=5 // pred_fallthru
      _
    %p278 = scmp.lt.s32.totalorder %s15, 2
    // Predicated region
    $region37: #{tpu_custom_call.1} parent=5 // pred_check
      %p279 = pneg %p278
    $region38: #{tpu_custom_call.1} parent=5 // pred_check_branch
      %281 = sbr.rel (%p279) target = $region40
    $region39: #{tpu_custom_call.1} parent=5 // pred_region
      // Predicated region
      $region41: #{tpu_custom_call.1} parent=39 // pred_check
        %p282 = pneg %p35
      $region42: #{tpu_custom_call.1} parent=39 // pred_check_branch
        %284 = sbr.rel (%p282) target = $region44
      $region43: #{tpu_custom_call.1} parent=39 // pred_region
        %p285 = scmp.lt.s32.totalorder %s15, 1
        %s286 = scalar_select %p285, %s15, 1
        %s287 = smul.addr %s286, 2
        %s288 = smul.addr %s287, 8
        %s289 = scalar_lea.vmem %s0, %s288
      $region44: #{tpu_custom_call.1} parent=39 // pred_fallthru
        _
      // Predicated region
      $region45: #{tpu_custom_call.1} parent=39 // pred_check
        %p290 = pneg %p61
      $region46: #{tpu_custom_call.1} parent=39 // pred_check_branch
        %292 = sbr.rel (%p290) target = $region48
      $region47: #{tpu_custom_call.1} parent=39 // pred_region
        %p293 = scmp.lt.s32.totalorder %s15, 1
        %s294 = scalar_select %p293, %s15, 1
        %s295 = smul.addr %s294, 8
        %s296 = scalar_lea.vmem %s1, %s295
      $region48: #{tpu_custom_call.1} parent=39 // pred_fallthru
        _
      // Predicated region
      $region49: #{tpu_custom_call.1} parent=39 // pred_check
        %p297 = pneg %p87
      $region50: #{tpu_custom_call.1} parent=39 // pred_check_branch
        %299 = sbr.rel (%p297) target = $region52
      $region51: #{tpu_custom_call.1} parent=39 // pred_region
        %p300 = scmp.lt.s32.totalorder %s15, 1
        %s301 = scalar_select %p300, %s15, 1
        %s302 = smul.addr %s301, 8
        %s303 = scalar_lea.vmem %s2, %s302
      $region52: #{tpu_custom_call.1} parent=39 // pred_fallthru
        _
    $region40: #{tpu_custom_call.1} parent=5 // pred_fallthru
      _
    %p304 = scmp.le.s32.totalorder 1, %s15
    %p305 = scmp.lt.s32.totalorder %s15, 3
    %p306 = pnand %p304, %p305
    %p307 = pneg %p306
    // Predicated region
    $region53: #{tpu_custom_call.1} parent=5 // pred_check
      _
    $region54: #{tpu_custom_call.1} parent=5 // pred_check_branch
      %309 = sbr.rel (%p306) target = $region56
    $region55: #{tpu_custom_call.1} parent=5 // pred_region
      %s310 = ssub.s32 %s15, 1
      %p311 = scmp.lt.s32.totalorder %s20, 1
      %s312 = scalar_select %p311, %s20, 1
      %s313 = smul.addr %s312, 2
      %s314 = smul.addr %s313, 8
      %s315 = scalar_lea.vmem %s0, %s314
      %p316 = pneg %p41
      %p317 = pneg %p38
      %p318 = scmp.lt.s32.totalorder %s20, 1
      %s319 = scalar_select %p318, %s20, 1
      %s320 = smul.addr %s319, 8
      %s321 = scalar_lea.vmem %s1, %s320
      %p322 = pneg %p67
      %p323 = pneg %p64
      %p324 = scmp.lt.s32.totalorder %s20, 1
      %s325 = scalar_select %p324, %s20, 1
      %s326 = smul.addr %s325, 8
      %s327 = scalar_lea.vmem %s2, %s326
      %p328 = pneg %p93
      %p329 = pneg %p90
      %p330 = pneg %p114
      %p331 = pneg %p111
      %p332 = pneg %p135
      %p333 = pneg %p132
      %p334 = pneg %p156
      %p335 = pneg %p153
      %p336 = pneg %p177
      %p337 = pneg %p174
      %p338 = pneg %p198
      %p339 = pneg %p195
      %p340 = pneg %p219
      %p341 = pneg %p216
      %p342 = pneg %p245
      %p343 = pneg %p242
      %p344 = scmp.lt.s32.totalorder %s20, 1
      %s345 = scalar_select %p344, %s20, 1
      %s346 = smul.addr %s345, 2
      %s347 = smul.addr %s346, 8
      %s348 = scalar_lea.vmem %s9, %s347
      %p349 = scmp.lt.s32.totalorder %s20, 1
      %s350 = scalar_select %p349, %s20, 1
      %s351 = smul.addr %s350, 2
      %s352 = smul.addr %s351, 8
      %s353 = scalar_lea.vmem %s0, %s352
      %p354 = scmp.lt.s32.totalorder %s20, 1
      %s355 = scalar_select %p354, %s20, 1
      %s356 = smul.addr %s355, 8
      %s357 = scalar_lea.vmem %s1, %s356
      %p358 = scmp.lt.s32.totalorder %s20, 1
      %s359 = scalar_select %p358, %s20, 1
      %s360 = smul.addr %s359, 8
      %s361 = scalar_lea.vmem %s2, %s360
      %p362 = scmp.lt.s32.totalorder %s20, 1
      %s363 = scalar_select %p362, %s20, 1
      %s364 = smul.addr %s363, 2
      %s365 = smul.addr %s364, 8
      %s366 = scalar_lea.vmem %s9, %s365
      %v367 = vld [vmem:[%s8] sm:$0x1]
      %v368 = vld [vmem:[%s353] sm:$0xff]
      %v369 = vld [vmem:[%s353 + $0x8] sm:$0xf]
      %v370 = vld [vmem:[%s357] sm:$0xff]
      %v371 = vld [vmem:[%s361] sm:$0xff]
      %v372 = vld [vmem:[%s3] sm:$0xff]
      %v373 = vld [vmem:[%s3 + $0x8] sm:$0xff]
      %v374 = vld [vmem:[%s4] sm:$0x1]
      %v376 = vlaneseq
      %v377 = vshrl.u32 %v376, 7
      %v378 = vsub.s32 0, %v377
      %v379 = vrot.slane %v374, %v378
      %vm381 = vcmask 130048
      %v383 = vsel %vm381, %v368, 0
      %v386 = vsel %vm381, %v369, 0
      %388 = vmatprep.subr.mxu0 0.0
      %389 = vmatpush1.msra.mxu0 %v372
      %390 = vmatprep.subr.mxu0 0.0
      %391 = vmatpush1.msra.mxu0 %v373
      %392 = vmatprep.subr.mxu0 0.0
      %393 = vmatpush1.msra.mxu0 0.0
      %394 = vmatprep.subr.mxu0 0.0
      %395 = vmatpush1.msra.mxu0 0.0
      %396 = vmatprep.subr.mxu0 0.0
      %397 = vmatpush1.msra.mxu0 0.0
      %398 = vmatprep.subr.mxu0 0.0
      %399 = vmatpush1.msra.mxu0 0.0
      %400 = vmatprep.subr.mxu0 0.0
      %401 = vmatpush1.msra.mxu0 0.0
      %402 = vmatprep.subr.mxu0 0.0
      %403 = vmatpush1.msra.mxu0 0.0
      %404 = vmatprep.subr.mxu0 0.0
      %405 = vmatpush1.msra.mxu0 0.0
      %406 = vmatprep.subr.mxu0 0.0
      %407 = vmatpush1.msra.mxu0 0.0
      %408 = vmatprep.subr.mxu0 0.0
      %409 = vmatpush1.msra.mxu0 0.0
      %410 = vmatprep.subr.mxu0 0.0
      %411 = vmatpush1.msra.mxu0 0.0
      %412 = vmatprep.subr.mxu0 0.0
      %413 = vmatpush1.msra.mxu0 0.0
      %414 = vmatprep.subr.mxu0 0.0
      %415 = vmatpush1.msra.mxu0 0.0
      %416 = vmatprep.subr.mxu0 0.0
      %417 = vmatpush1.msra.mxu0 0.0
      %418 = vmatprep.subr.mxu0 0.0
      %419 = vmatpush1.msra.mxu0 0.0
      %420 = vmatprep.subr.mxu0 0.0
      %421 = vmatpush1.msra.mxu0 0.0
      %422 = vmatprep.subr.mxu0 0.0
      %423 = vmatpush1.msra.mxu0 0.0
      %424 = vmatprep.subr.mxu0 0.0
      %425 = vmatpush1.msra.mxu0 0.0
      %426 = vmatprep.subr.mxu0 0.0
      %427 = vmatpush1.msra.mxu0 0.0
      %428 = vmatprep.subr.mxu0 0.0
      %429 = vmatpush1.msra.mxu0 0.0
      %430 = vmatprep.subr.mxu0 0.0
      %431 = vmatpush1.msra.mxu0 0.0
      %432 = vmatprep.subr.mxu0 0.0
      %433 = vmatpush1.msra.mxu0 0.0
      %434 = vmatprep.subr.mxu0 0.0
      %435 = vmatpush1.msra.mxu0 0.0
      %436 = vmatprep.subr.mxu0 0.0
      %437 = vmatpush1.msra.mxu0 0.0
      %438 = vmatprep.subr.mxu0 0.0
      %439 = vmatpush1.msra.mxu0 0.0
      %440 = vmatprep.subr.mxu0 0.0
      %441 = vmatpush1.msra.mxu0 0.0
      %442 = vmatprep.subr.mxu0 0.0
      %443 = vmatpush1.msra.mxu0 0.0
      %444 = vmatprep.subr.mxu0 0.0
      %445 = vmatpush1.msra.mxu0 0.0
      %446 = vmatprep.subr.mxu0 0.0
      %447 = vmatpush1.msra.mxu0 0.0
      %448 = vmatprep.subr.mxu0 0.0
      %449 = vmatpush1.msra.mxu0 0.0
      %450 = vmatprep.subr.mxu0 0.0
      %451 = vmatpush1.msra.mxu0 0.0
      %452 = vmatprep.mubr.f32.mxu0 0.0
      %453 = vmatmul.mubr.f32.gmra.mrb[0].mxu0 %v383
      %v454 = vpop.f32.mrb[0].mxu0
      %v455 = vadd.f32 %v379, %v454
      %v456 = vpop.f32.mrb[0].mxu0
      %457 = vmatprep.mubr.f32.mxu0 0.0
      %458 = vmatmul.mubr.f32.gmra.mrb[0].mxu0 %v386
      %v459 = vpop.f32.mrb[0].mxu0
      %v460 = vadd.f32 %v379, %v459
      %v461 = vpop.f32.mrb[0].mxu0
      %462 = vdwg.mxu0
      %v463 = vld [vmem:[%s5] sm:$0xff]
      %v464 = vld [vmem:[%s5 + $0x8] sm:$0xff]
      %v465 = vld [vmem:[%s6] sm:$0x1]
      %v467 = vlaneseq
      %v468 = vshrl.u32 %v467, 7
      %v469 = vsub.s32 0, %v468
      %v470 = vrot.slane %v465, %v469
      %v473 = vsel %vm381, %v370, 0
      %475 = vmatprep.subr.mxu0 0.0
      %476 = vmatpush1.msra.mxu0 %v463
      %477 = vmatprep.subr.mxu0 0.0
      %478 = vmatpush1.msra.mxu0 %v464
      %479 = vmatprep.subr.mxu0 0.0
      %480 = vmatpush1.msra.mxu0 0.0
      %481 = vmatprep.subr.mxu0 0.0
      %482 = vmatpush1.msra.mxu0 0.0
      %483 = vmatprep.subr.mxu0 0.0
      %484 = vmatpush1.msra.mxu0 0.0
      %485 = vmatprep.subr.mxu0 0.0
      %486 = vmatpush1.msra.mxu0 0.0
      %487 = vmatprep.subr.mxu0 0.0
      %488 = vmatpush1.msra.mxu0 0.0
      %489 = vmatprep.subr.mxu0 0.0
      %490 = vmatpush1.msra.mxu0 0.0
      %491 = vmatprep.subr.mxu0 0.0
      %492 = vmatpush1.msra.mxu0 0.0
      %493 = vmatprep.subr.mxu0 0.0
      %494 = vmatpush1.msra.mxu0 0.0
      %495 = vmatprep.subr.mxu0 0.0
      %496 = vmatpush1.msra.mxu0 0.0
      %497 = vmatprep.subr.mxu0 0.0
      %498 = vmatpush1.msra.mxu0 0.0
      %499 = vmatprep.subr.mxu0 0.0
      %500 = vmatpush1.msra.mxu0 0.0
      %501 = vmatprep.subr.mxu0 0.0
      %502 = vmatpush1.msra.mxu0 0.0
      %503 = vmatprep.subr.mxu0 0.0
      %504 = vmatpush1.msra.mxu0 0.0
      %505 = vmatprep.subr.mxu0 0.0
      %506 = vmatpush1.msra.mxu0 0.0
      %507 = vmatprep.subr.mxu0 0.0
      %508 = vmatpush1.msra.mxu0 0.0
      %509 = vmatprep.subr.mxu0 0.0
      %510 = vmatpush1.msra.mxu0 0.0
      %511 = vmatprep.subr.mxu0 0.0
      %512 = vmatpush1.msra.mxu0 0.0
      %513 = vmatprep.subr.mxu0 0.0
      %514 = vmatpush1.msra.mxu0 0.0
      %515 = vmatprep.subr.mxu0 0.0
      %516 = vmatpush1.msra.mxu0 0.0
      %517 = vmatprep.subr.mxu0 0.0
      %518 = vmatpush1.msra.mxu0 0.0
      %519 = vmatprep.subr.mxu0 0.0
      %520 = vmatpush1.msra.mxu0 0.0
      %521 = vmatprep.subr.mxu0 0.0
      %522 = vmatpush1.msra.mxu0 0.0
      %523 = vmatprep.subr.mxu0 0.0
      %524 = vmatpush1.msra.mxu0 0.0
      %525 = vmatprep.subr.mxu0 0.0
      %526 = vmatpush1.msra.mxu0 0.0
      %527 = vmatprep.subr.mxu0 0.0
      %528 = vmatpush1.msra.mxu0 0.0
      %529 = vmatprep.subr.mxu0 0.0
      %530 = vmatpush1.msra.mxu0 0.0
      %531 = vmatprep.subr.mxu0 0.0
      %532 = vmatpush1.msra.mxu0 0.0
      %533 = vmatprep.subr.mxu0 0.0
      %534 = vmatpush1.msra.mxu0 0.0
      %535 = vmatprep.subr.mxu0 0.0
      %536 = vmatpush1.msra.mxu0 0.0
      %537 = vmatprep.subr.mxu0 0.0
      %538 = vmatpush1.msra.mxu0 0.0
      %539 = vmatprep.mubr.f32.mxu0 0.0
      %540 = vmatmul.mubr.f32.gmra.mrb[0].mxu0 %v473
      %v541 = vpop.f32.mrb[0].mxu0
      %v542 = vadd.f32 %v470, %v541
      %v543 = vpop.f32.mrb[0].mxu0
      %544 = vdwg.mxu0
      %v546 = vsel %vm381, %v455, 0
      %v549 = vsel %vm381, %v460, 0
      %v552 = vsel %vm381, %v542, 0
      %554 = vmatprep.subr.mxu0 0.0
      %555 = vmatpush1.xpose.msra.mxu0 %v552
      %556 = vmatprep.subr.mxu0 0.0
      %557 = vmatpush1.xpose.msra.mxu0 0.0
      %558 = vmatprep.subr.mxu0 0.0
      %559 = vmatpush1.xpose.msra.mxu0 0.0
      %560 = vmatprep.subr.mxu0 0.0
      %561 = vmatpush1.xpose.msra.mxu0 0.0
      %562 = vmatprep.subr.mxu0 0.0
      %563 = vmatpush1.xpose.msra.mxu0 0.0
      %564 = vmatprep.subr.mxu0 0.0
      %565 = vmatpush1.xpose.msra.mxu0 0.0
      %566 = vmatprep.subr.mxu0 0.0
      %567 = vmatpush1.xpose.msra.mxu0 0.0
      %568 = vmatprep.subr.mxu0 0.0
      %569 = vmatpush1.xpose.msra.mxu0 0.0
      %570 = vmatprep.subr.mxu0 0.0
      %571 = vmatpush1.xpose.msra.mxu0 0.0
      %572 = vmatprep.subr.mxu0 0.0
      %573 = vmatpush1.xpose.msra.mxu0 0.0
      %574 = vmatprep.subr.mxu0 0.0
      %575 = vmatpush1.xpose.msra.mxu0 0.0
      %576 = vmatprep.subr.mxu0 0.0
      %577 = vmatpush1.xpose.msra.mxu0 0.0
      %578 = vmatprep.subr.mxu0 0.0
      %579 = vmatpush1.xpose.msra.mxu0 0.0
      %580 = vmatprep.subr.mxu0 0.0
      %581 = vmatpush1.xpose.msra.mxu0 0.0
      %582 = vmatprep.subr.mxu0 0.0
      %583 = vmatpush1.xpose.msra.mxu0 0.0
      %584 = vmatprep.subr.mxu0 0.0
      %585 = vmatpush1.xpose.msra.mxu0 0.0
      %586 = vmatprep.subr.mxu0 0.0
      %587 = vmatpush1.xpose.msra.mxu0 0.0
      %588 = vmatprep.subr.mxu0 0.0
      %589 = vmatpush1.xpose.msra.mxu0 0.0
      %590 = vmatprep.subr.mxu0 0.0
      %591 = vmatpush1.xpose.msra.mxu0 0.0
      %592 = vmatprep.subr.mxu0 0.0
      %593 = vmatpush1.xpose.msra.mxu0 0.0
      %594 = vmatprep.subr.mxu0 0.0
      %595 = vmatpush1.xpose.msra.mxu0 0.0
      %596 = vmatprep.subr.mxu0 0.0
      %597 = vmatpush1.xpose.msra.mxu0 0.0
      %598 = vmatprep.subr.mxu0 0.0
      %599 = vmatpush1.xpose.msra.mxu0 0.0
      %600 = vmatprep.subr.mxu0 0.0
      %601 = vmatpush1.xpose.msra.mxu0 0.0
      %602 = vmatprep.subr.mxu0 0.0
      %603 = vmatpush1.xpose.msra.mxu0 0.0
      %604 = vmatprep.subr.mxu0 0.0
      %605 = vmatpush1.xpose.msra.mxu0 0.0
      %606 = vmatprep.subr.mxu0 0.0
      %607 = vmatpush1.xpose.msra.mxu0 0.0
      %608 = vmatprep.subr.mxu0 0.0
      %609 = vmatpush1.xpose.msra.mxu0 0.0
      %610 = vmatprep.subr.mxu0 0.0
      %611 = vmatpush1.xpose.msra.mxu0 0.0
      %612 = vmatprep.subr.mxu0 0.0
      %613 = vmatpush1.xpose.msra.mxu0 0.0
      %614 = vmatprep.subr.mxu0 0.0
      %615 = vmatpush1.xpose.msra.mxu0 0.0
      %616 = vmatprep.subr.mxu0 0.0
      %617 = vmatpush1.xpose.msra.mxu0 0.0
      %618 = vmatprep.mubr.f32.mxu0 0.0
      %619 = vmatmul.mubr.f32.gmra.mrb[0].mxu0 %v546
      %v620 = vpop.f32.mrb[0].mxu0
      %v621 = vadd.f32 0.0, %v620
      %v622 = vpop.f32.mrb[0].mxu0
      %623 = vmatprep.mubr.f32.mxu0 0.0
      %624 = vmatmul.mubr.f32.gmra.mrb[0].mxu0 %v549
      %v625 = vpop.f32.mrb[0].mxu0
      %v626 = vadd.f32 0.0, %v625
      %v627 = vpop.f32.mrb[0].mxu0
      %628 = vdwg.mxu0
      %v629 = vmul.f32 %v621, 0.25
      %v630 = vmul.f32 %v626, 0.25
      %vm631 = vcmask 64512
      %v632 = vsel %vm631, %v629, -inf
      %633 = vmax.xlane.f32.xlu0 %v632
      %v634 = vpop.xlane.xlu0 %633
      %vm635 = vcmask 60416
      %v636 = vsel %vm635, %v630, -inf
      %637 = vmax.xlane.f32.xlu0 %v636
      %v638 = vpop.xlane.xlu0 %637
      %v639 = vsub.f32 %v629, %v634
      %v640 = vsub.f32 %v630, %v638
      %v641 = vmul.f32 %v639, 1.442695
      %v642 = vpow.pop %v641
      %v643 = vmul.f32 %v640, 1.442695
      %v644 = vpow.pop %v643
      %v645 = vsel %vm631, %v642, 0.0
      %646 = vadd.xlane.f32.xlu0 %v645
      %v647 = vpop.xlane.xlu0 %646
      %v648 = vsel %vm635, %v644, 0.0
      %649 = vadd.xlane.f32.xlu0 %v648
      %v650 = vpop.xlane.xlu0 %649
      %v651 = vrcp.pop %v647
      %v652 = vrcp.pop %v650
      %v653 = vmul.f32 %v642, %v651
      %v654 = vmul.f32 %v644, %v652
      %v656 = vsel %vm631, %v653, 0
      %v659 = vsel %vm631, %v654, 0
      %661 = vmatprep.subr.mxu0 0.0
      %662 = vmatpush1.msra.mxu0 %v371
      %663 = vmatprep.subr.mxu0 0.0
      %664 = vmatpush1.msra.mxu0 0.0
      %665 = vmatprep.subr.mxu0 0.0
      %666 = vmatpush1.msra.mxu0 0.0
      %667 = vmatprep.subr.mxu0 0.0
      %668 = vmatpush1.msra.mxu0 0.0
      %669 = vmatprep.subr.mxu0 0.0
      %670 = vmatpush1.msra.mxu0 0.0
      %671 = vmatprep.subr.mxu0 0.0
      %672 = vmatpush1.msra.mxu0 0.0
      %673 = vmatprep.subr.mxu0 0.0
      %674 = vmatpush1.msra.mxu0 0.0
      %675 = vmatprep.subr.mxu0 0.0
      %676 = vmatpush1.msra.mxu0 0.0
      %677 = vmatprep.subr.mxu0 0.0
      %678 = vmatpush1.msra.mxu0 0.0
      %679 = vmatprep.subr.mxu0 0.0
      %680 = vmatpush1.msra.mxu0 0.0
      %681 = vmatprep.subr.mxu0 0.0
      %682 = vmatpush1.msra.mxu0 0.0
      %683 = vmatprep.subr.mxu0 0.0
      %684 = vmatpush1.msra.mxu0 0.0
      %685 = vmatprep.subr.mxu0 0.0
      %686 = vmatpush1.msra.mxu0 0.0
      %687 = vmatprep.subr.mxu0 0.0
      %688 = vmatpush1.msra.mxu0 0.0
      %689 = vmatprep.subr.mxu0 0.0
      %690 = vmatpush1.msra.mxu0 0.0
      %691 = vmatprep.subr.mxu0 0.0
      %692 = vmatpush1.msra.mxu0 0.0
      %693 = vmatprep.subr.mxu0 0.0
      %694 = vmatpush1.msra.mxu0 0.0
      %695 = vmatprep.subr.mxu0 0.0
      %696 = vmatpush1.msra.mxu0 0.0
      %697 = vmatprep.subr.mxu0 0.0
      %698 = vmatpush1.msra.mxu0 0.0
      %699 = vmatprep.subr.mxu0 0.0
      %700 = vmatpush1.msra.mxu0 0.0
      %701 = vmatprep.subr.mxu0 0.0
      %702 = vmatpush1.msra.mxu0 0.0
      %703 = vmatprep.subr.mxu0 0.0
      %704 = vmatpush1.msra.mxu0 0.0
      %705 = vmatprep.subr.mxu0 0.0
      %706 = vmatpush1.msra.mxu0 0.0
      %707 = vmatprep.subr.mxu0 0.0
      %708 = vmatpush1.msra.mxu0 0.0
      %709 = vmatprep.subr.mxu0 0.0
      %710 = vmatpush1.msra.mxu0 0.0
      %711 = vmatprep.subr.mxu0 0.0
      %712 = vmatpush1.msra.mxu0 0.0
      %713 = vmatprep.subr.mxu0 0.0
      %714 = vmatpush1.msra.mxu0 0.0
      %715 = vmatprep.subr.mxu0 0.0
      %716 = vmatpush1.msra.mxu0 0.0
      %717 = vmatprep.subr.mxu0 0.0
      %718 = vmatpush1.msra.mxu0 0.0
      %719 = vmatprep.subr.mxu0 0.0
      %720 = vmatpush1.msra.mxu0 0.0
      %721 = vmatprep.subr.mxu0 0.0
      %722 = vmatpush1.msra.mxu0 0.0
      %723 = vmatprep.subr.mxu0 0.0
      %724 = vmatpush1.msra.mxu0 0.0
      %725 = vmatprep.mubr.f32.mxu0 0.0
      %726 = vmatmul.mubr.f32.gmra.mrb[0].mxu0 %v656
      %v727 = vpop.f32.mrb[0].mxu0
      %v728 = vadd.f32 0.0, %v727
      %v729 = vpop.f32.mrb[0].mxu0
      %730 = vmatprep.mubr.f32.mxu0 0.0
      %731 = vmatmul.mubr.f32.gmra.mrb[0].mxu0 %v659
      %v732 = vpop.f32.mrb[0].mxu0
      %v733 = vadd.f32 0.0, %v732
      %v734 = vpop.f32.mrb[0].mxu0
      %735 = vdwg.mxu0
      %v736 = vld [vmem:[%s7] sm:$0xf]
      %v738 = vlaneseq
      %v739 = vshrl.u32 %v738, 7
      %v740 = vsub.s32 0, %v739
      %v741 = vrot.slane %v367, %v740
      %vm743 = vcmask 31744
      %v745 = vsel %vm743, %v728, 0
      %v748 = vsel %vm743, %v733, 0
      %vm750 = vcmask 1043456
      %v752 = vsel %vm750, %v736, 0
      %754 = vmatprep.subr.mxu0 0.0
      %755 = vmatpush1.msra.mxu0 %v752
      %756 = vmatprep.subr.mxu0 0.0
      %757 = vmatpush1.msra.mxu0 0.0
      %758 = vmatprep.subr.mxu0 0.0
      %759 = vmatpush1.msra.mxu0 0.0
      %760 = vmatprep.subr.mxu0 0.0
      %761 = vmatpush1.msra.mxu0 0.0
      %762 = vmatprep.subr.mxu0 0.0
      %763 = vmatpush1.msra.mxu0 0.0
      %764 = vmatprep.subr.mxu0 0.0
      %765 = vmatpush1.msra.mxu0 0.0
      %766 = vmatprep.subr.mxu0 0.0
      %767 = vmatpush1.msra.mxu0 0.0
      %768 = vmatprep.subr.mxu0 0.0
      %769 = vmatpush1.msra.mxu0 0.0
      %770 = vmatprep.subr.mxu0 0.0
      %771 = vmatpush1.msra.mxu0 0.0
      %772 = vmatprep.subr.mxu0 0.0
      %773 = vmatpush1.msra.mxu0 0.0
      %774 = vmatprep.subr.mxu0 0.0
      %775 = vmatpush1.msra.mxu0 0.0
      %776 = vmatprep.subr.mxu0 0.0
      %777 = vmatpush1.msra.mxu0 0.0
      %778 = vmatprep.subr.mxu0 0.0
      %779 = vmatpush1.msra.mxu0 0.0
      %780 = vmatprep.subr.mxu0 0.0
      %781 = vmatpush1.msra.mxu0 0.0
      %782 = vmatprep.subr.mxu0 0.0
      %783 = vmatpush1.msra.mxu0 0.0
      %784 = vmatprep.subr.mxu0 0.0
      %785 = vmatpush1.msra.mxu0 0.0
      %786 = vmatprep.subr.mxu0 0.0
      %787 = vmatpush1.msra.mxu0 0.0
      %788 = vmatprep.subr.mxu0 0.0
      %789 = vmatpush1.msra.mxu0 0.0
      %790 = vmatprep.subr.mxu0 0.0
      %791 = vmatpush1.msra.mxu0 0.0
      %792 = vmatprep.subr.mxu0 0.0
      %793 = vmatpush1.msra.mxu0 0.0
      %794 = vmatprep.subr.mxu0 0.0
      %795 = vmatpush1.msra.mxu0 0.0
      %796 = vmatprep.subr.mxu0 0.0
      %797 = vmatpush1.msra.mxu0 0.0
      %798 = vmatprep.subr.mxu0 0.0
      %799 = vmatpush1.msra.mxu0 0.0
      %800 = vmatprep.subr.mxu0 0.0
      %801 = vmatpush1.msra.mxu0 0.0
      %802 = vmatprep.subr.mxu0 0.0
      %803 = vmatpush1.msra.mxu0 0.0
      %804 = vmatprep.subr.mxu0 0.0
      %805 = vmatpush1.msra.mxu0 0.0
      %806 = vmatprep.subr.mxu0 0.0
      %807 = vmatpush1.msra.mxu0 0.0
      %808 = vmatprep.subr.mxu0 0.0
      %809 = vmatpush1.msra.mxu0 0.0
      %810 = vmatprep.subr.mxu0 0.0
      %811 = vmatpush1.msra.mxu0 0.0
      %812 = vmatprep.subr.mxu0 0.0
      %813 = vmatpush1.msra.mxu0 0.0
      %814 = vmatprep.subr.mxu0 0.0
      %815 = vmatpush1.msra.mxu0 0.0
      %816 = vmatprep.subr.mxu0 0.0
      %817 = vmatpush1.msra.mxu0 0.0
      %818 = vmatprep.mubr.f32.mxu0 0.0
      %819 = vmatmul.mubr.f32.gmra.mrb[0].mxu0 %v745
      %v820 = vpop.f32.mrb[0].mxu0
      %v821 = vadd.f32 %v741, %v820
      %v822 = vpop.f32.mrb[0].mxu0
      %823 = vmatprep.mubr.f32.mxu0 0.0
      %824 = vmatmul.mubr.f32.gmra.mrb[0].mxu0 %v748
      %v825 = vpop.f32.mrb[0].mxu0
      %v826 = vadd.f32 %v741, %v825
      %v827 = vpop.f32.mrb[0].mxu0
      %828 = vdwg.mxu0
      %829 = vst.msk [vmem:[%s366] sm:$0xff] %vm381, %v821
      %vm830 = vcmask 125952
      %831 = vst.msk [vmem:[%s366 + $0x8] sm:$0xf] %vm830, %v826
      %p832 = scmp.lt.s32.totalorder %s20, 1
      %s833 = scalar_select %p832, %s20, 1
      %s834 = smul.addr %s833, 2
      %s835 = smul.addr %s834, 8
      %s836 = scalar_lea.vmem %s9, %s835
      // Predicated region
      $region57: #{tpu_custom_call.1} parent=55 // pred_check
        %p837 = pneg %p242
      $region58: #{tpu_custom_call.1} parent=55 // pred_check_branch
        %839 = sbr.rel (%p837) target = $region60
      $region59: #{tpu_custom_call.1} parent=55 // pred_region
        _
      $region60: #{tpu_custom_call.1} parent=55 // pred_fallthru
        _
    $region56: #{tpu_custom_call.1} parent=5 // pred_fallthru
      _
    %p840 = scmp.le.s32.totalorder 2, %s15
    // Predicated region
    $region61: #{tpu_custom_call.1} parent=5 // pred_check
      %p841 = pneg %p840
    $region62: #{tpu_custom_call.1} parent=5 // pred_check_branch
      %843 = sbr.rel (%p841) target = $region64
    $region63: #{tpu_custom_call.1} parent=5 // pred_region
      %s844 = ssub.s32 %s15, 2
      // Predicated region
      $region65: #{tpu_custom_call.1} parent=63 // pred_check
        %p845 = pneg %p248
      $region66: #{tpu_custom_call.1} parent=63 // pred_check_branch
        %847 = sbr.rel (%p845) target = $region68
      $region67: #{tpu_custom_call.1} parent=63 // pred_region
        %p848 = scmp.lt.s32.totalorder %s21, 1
        %s849 = scalar_select %p848, %s21, 1
        %s850 = smul.addr %s849, 2
        %s851 = smul.addr %s850, 8
        %s852 = scalar_lea.vmem %s9, %s851
      $region68: #{tpu_custom_call.1} parent=63 // pred_fallthru
        _
    $region64: #{tpu_custom_call.1} parent=5 // pred_fallthru
      _
  $region6: #{tpu_custom_call.1} parent=0 // loop_footer
    %s19 = sadd.s32 1, %s15
  $region7: #{tpu_custom_call.1} parent=0 // loop_footer_branch
    %14 = sbr.rel target = $region3
  $region8: #{tpu_custom_call.1} parent=0 // loop_exit
    _

</llo_original>
